<compile_context>
chip_gen: v6e
topology: v6e:2x2x1
jax: 0.10.0
libtpu: 0.0.40
codegen_flags: <defaults>
</compile_context>

<pallas_src>
import math
import jax
import jax.numpy as jnp
from jax import lax
from jax.experimental import pallas as pl
from jax.experimental.pallas import tpu as pltpu


def _round_up(x, m):
    return (x + m - 1) // m * m


def _vmem_specs(n):
    return [pl.BlockSpec(memory_space=pltpu.MemorySpace.VMEM) for _ in range(n)]


# ---------------------------------------------------------------------------
# Kernel 1: diffusion_step_encoder
#   SinusoidalPosEmb(hidden) -> Linear(hidden, 4*hidden) -> Mish -> Linear(4*hidden, hidden)
# The sinusoidal concat [sin|cos] is fused by splitting W1 into its sin / cos
# row-halves, avoiding an in-kernel lane concat.  B is tiny -> single shot.
# ---------------------------------------------------------------------------
def diff_step_kernel(t_ref, freq_ref, w1s_ref, w1c_ref, b1_ref, w2_ref, b2_ref,
                     out_ref):
    arg = t_ref[...] * freq_ref[...]                      # (B, half)
    s = jnp.sin(arg)
    c = jnp.cos(arg)
    h1 = (jnp.dot(s, w1s_ref[...], preferred_element_type=jnp.float32)
          + jnp.dot(c, w1c_ref[...], preferred_element_type=jnp.float32)
          + b1_ref[...])                                  # (B, 4h)
    h1 = h1 * jnp.tanh(jax.nn.softplus(h1))               # Mish (EUP path)
    out_ref[...] = (jnp.dot(h1, w2_ref[...], preferred_element_type=jnp.float32)
                    + b2_ref[...])                        # (B, h)


def run_diffusion_step_encoder(diffusion_step, dse_params):
    B = diffusion_step.shape[0]
    hidden = dse_params["w2"].shape[1]
    return pl.pallas_call(
        diff_step_kernel,
        out_shape=jax.ShapeDtypeStruct((B, hidden), jnp.float32),
        in_specs=_vmem_specs(7),
        out_specs=pl.BlockSpec(memory_space=pltpu.MemorySpace.VMEM),
    )(diffusion_step.reshape(B, 1).astype(jnp.float32),
      dse_params["freq"], dse_params["w1_sin"], dse_params["w1_cos"],
      dse_params["b1"], dse_params["w2"], dse_params["b2"])


# ---------------------------------------------------------------------------
# Kernel 2 (fused): action_queries + embed_noisy_actions + action head
#   q    = aq_weight[row % chunk]                 (expanded in-kernel, no HBM bcast)
#   x    = q + noisy_actions @ W_ena + b_ena
#   h    = x @ W_mlp0 + b0
#   h    = h @ W_mlp1 + b1
#   out  = h @ [W_arm | W_grip | 0-pad] + [b_arm | b_grip | 0-pad]   (lane-dense)
# Gridded over the M (rows) axis; all weights resident in VMEM.
# ---------------------------------------------------------------------------
def fused_action_head_kernel(na_ref, aq_ref, ena_w_ref, ena_b_ref,
                             w0_ref, b0_ref, w1_ref, b1_ref,
                             wh_ref, bh_ref, out_ref):
    tm = na_ref.shape[0]
    chunk, hidden = aq_ref.shape

    # Expand action-query table to this row tile (row m uses aq[m % chunk]).
    start = pl.program_id(0) * tm
    row = start + lax.broadcasted_iota(jnp.int32, (tm, hidden), 0)
    cidx = row % chunk
    q = jnp.zeros((tm, hidden), jnp.float32)
    for c in range(chunk):                                 # chunk is small & static
        q = jnp.where(cidx == c, aq_ref[c, :][None, :], q)

    x = (q
         + jnp.dot(na_ref[...], ena_w_ref[...], preferred_element_type=jnp.float32)
         + ena_b_ref[...])                                 # (tm, hidden)
    h = jnp.dot(x, w0_ref[...], preferred_element_type=jnp.float32) + b0_ref[...]
    h = jnp.dot(h, w1_ref[...], preferred_element_type=jnp.float32) + b1_ref[...]
    out_ref[...] = (jnp.dot(h, wh_ref[...], preferred_element_type=jnp.float32)
                    + bh_ref[...])                         # (tm, HEAD_PAD) lane-dense


def run_fused_action_head(na_flat, params, *, chunk):
    M, act_dim = na_flat.shape
    hidden = params["aq_weight"].shape[1]
    half = hidden // 2
    head_pad = params["head_w"].shape[1]

    # Row tiling: multiples of 8 sublanes, up to 512 rows per tile.
    m8 = _round_up(M, 8)
    tm = min(512, m8)
    m_pad = _round_up(M, tm)
    if m_pad != M:
        na_flat = jnp.pad(na_flat, ((0, m_pad - M), (0, 0)))

    const = lambda i: (0, 0)      # resident weights / biases
    out_pad = pl.pallas_call(
        fused_action_head_kernel,
        out_shape=jax.ShapeDtypeStruct((m_pad, head_pad), jnp.float32),
        grid=(m_pad // tm,),
        in_specs=[
            pl.BlockSpec((tm, act_dim), lambda i: (i, 0)),         # noisy actions tile
            pl.BlockSpec((chunk, hidden), const),                  # action-query table
            pl.BlockSpec((act_dim, hidden), const),                # ena_w
            pl.BlockSpec((1, hidden), const),                      # ena_b
            pl.BlockSpec((hidden, half), const),                   # mlp0_w
            pl.BlockSpec((1, half), const),                        # mlp0_b
            pl.BlockSpec((half, half), const),                     # mlp1_w
            pl.BlockSpec((1, half), const),                        # mlp1_b
            pl.BlockSpec((half, head_pad), const),                 # combined head w
            pl.BlockSpec((1, head_pad), const),                    # combined head b
        ],
        out_specs=pl.BlockSpec((tm, head_pad), lambda i: (i, 0)),
        compiler_params=pltpu.CompilerParams(
            dimension_semantics=("parallel",),
            vmem_limit_bytes=48 * 1024 * 1024,
        ),
    )(na_flat, params["aq_weight"], params["ena_w"], params["ena_b"],
      params["mlp0_w"], params["mlp0_b"], params["mlp1_w"], params["mlp1_b"],
      params["head_w"], params["head_b"])

    return out_pad[:M]            # strip row padding; lane slice done by caller


# ---------------------------------------------------------------------------
# Parameter construction (deterministic, in-script)
# ---------------------------------------------------------------------------
def init_params(key, *, hidden, act_dim, chunk_size, sequence_length):
    ks = jax.random.split(key, 16)
    half = hidden // 2
    scale = 0.02

    def lin(k, d_in, d_out):
        kw, kb = jax.random.split(k)
        w = scale * jax.random.normal(kw, (d_in, d_out), jnp.float32)   # (in,out)
        b = scale * jax.random.normal(kb, (1, d_out), jnp.float32)
        return w, b

    # SinusoidalPosEmb frequency table (matches PyTorch: log(10000)/(half-1))
    emb_scale = math.log(10000.0) / max(half - 1, 1)
    freq = jnp.exp(jnp.arange(half, dtype=jnp.float32) * -emb_scale).reshape(1, half)

    w1, b1 = lin(ks[0], hidden, hidden * 4)      # Linear(hidden, 4*hidden)
    w2, b2 = lin(ks[1], hidden * 4, hidden)      # Linear(4*hidden, hidden)
    dse = dict(freq=freq, w1_sin=w1[:half], w1_cos=w1[half:], b1=b1, w2=w2, b2=b2)

    # action_queries embedding table (chunk_size, hidden)
    aq_weight = scale * jax.random.normal(ks[2], (chunk_size, hidden), jnp.float32)

    # embed_noisy_actions: weight filled with zeros (per module), bias random
    ena_w = jnp.zeros((act_dim, hidden), jnp.float32)
    ena_b = scale * jax.random.normal(ks[3], (1, hidden), jnp.float32)

    # embed_timestep (only consumed by the transformer; kept for completeness)
    embed_timestep = scale * jax.random.normal(ks[4], (sequence_length, hidden),
                                               jnp.float32)

    mlp0_w, mlp0_b = lin(ks[5], hidden, half)
    mlp1_w, mlp1_b = lin(ks[6], half, half)
    arm_w, arm_b = lin(ks[7], half, act_dim - 1)
    grip_w, grip_b = lin(ks[8], half, 1)

    # Combined lane-dense head: [arm | grip | zero-pad] padded to 128 lanes.
    head_pad = max(128, _round_up(act_dim, 128))
    head_w = jnp.zeros((half, head_pad), jnp.float32)
    head_w = head_w.at[:, :act_dim - 1].set(arm_w)
    head_w = head_w.at[:, act_dim - 1:act_dim].set(grip_w)
    head_b = jnp.zeros((1, head_pad), jnp.float32)
    head_b = head_b.at[:, :act_dim - 1].set(arm_b)
    head_b = head_b.at[:, act_dim - 1:act_dim].set(grip_b)

    return dict(dse=dse, aq_weight=aq_weight, ena_w=ena_w, ena_b=ena_b,
                embed_timestep=embed_timestep,
                mlp0_w=mlp0_w, mlp0_b=mlp0_b, mlp1_w=mlp1_w, mlp1_b=mlp1_b,
                head_w=head_w, head_b=head_b)


# ---------------------------------------------------------------------------
# _predict forward (mode == 'predict')
# ---------------------------------------------------------------------------
def oxe_predict(params, stacked_inputs, noisy_obs, noisy_hand_obs,
                noisy_actions, diffusion_step, *, act_dim):
    B, T, chunk, ad = noisy_actions.shape
    hidden = params["aq_weight"].shape[1]
    M = B * T * chunk

    # --- diffusion step embedding (Pallas kernel 1) ------------------------
    d_emb = run_diffusion_step_encoder(diffusion_step, params["dse"])   # (B, h)
    diffusion_step_emb = jnp.broadcast_to(
        d_emb[:, None, None, :], (B, T, 1, hidden))                     # repeat over T

    # --- transformer backbone ----------------------------------------------
    # TODO(synk): STDiT_Transformer (Open-Sora) backbone + CLIP/VAE encoders have
    # no in-script Pallas equivalent; action heads consume the pre-transformer
    # action_queries and the noisy patch tokens are returned as obs predictions.
    obs_preds = noisy_obs            # (B, T, H, W, C) — passthrough stand-in
    obs_hand_preds = noisy_hand_obs

    # --- fused action_queries + action head (Pallas kernel 2, gridded) ------
    na_flat = noisy_actions.reshape(M, ad).astype(jnp.float32)
    head_out = run_fused_action_head(na_flat, params, chunk=chunk)      # (M, 128)

    arm_action_preds = head_out[:, :act_dim - 1].reshape(B, T, chunk, act_dim - 1)
    gripper_action_preds = head_out[:, act_dim - 1:act_dim].reshape(B, T, chunk, 1)

    return {
        "obs_preds": obs_preds,
        "obs_hand_preds": obs_hand_preds,
        "arm_action_preds": arm_action_preds,
        "gripper_action_preds": gripper_action_preds,
        "diffusion_step_emb": diffusion_step_emb,
    }


# ---------------------------------------------------------------------------
if __name__ == "__main__":
    # Small, module-consistent shapes
    B, T = 2, 2                  # batch, sequence_length
    chunk_size = 4
    hidden = 32
    act_dim = 7
    H = W = 4                    # latent spatial
    C_lat = 4                    # latent channels

    key = jax.random.PRNGKey(0)
    k_params, k_na, k_obs, k_hobs, k_lang, k_p, k_hp, k_t = jax.random.split(key, 8)

    params = init_params(k_params, hidden=hidden, act_dim=act_dim,
                         chunk_size=chunk_size, sequence_length=T)

    noisy_actions = jax.random.normal(k_na, (B, T, chunk_size, act_dim), jnp.float32)
    noisy_obs = jax.random.normal(k_obs, (B, T, H, W, C_lat), jnp.float32)
    noisy_hand_obs = jax.random.normal(k_hobs, (B, T, H, W, C_lat), jnp.float32)
    diffusion_step = jax.random.randint(k_t, (B,), 0, 100).astype(jnp.float32)

    # stacked_inputs as produced by _encode (wo_state=True):
    lang_embeddings = jax.random.normal(k_lang, (B, 1, 512), jnp.float32)
    patch_embeddings = jax.random.normal(k_p, (B, C_lat, T, H, W), jnp.float32)
    hand_patch_embeddings = jax.random.normal(k_hp, (B, C_lat, T, H, W), jnp.float32)
    stacked_inputs = (lang_embeddings, patch_embeddings, hand_patch_embeddings)

    out = oxe_predict(params, stacked_inputs, noisy_obs, noisy_hand_obs,
                      noisy_actions, diffusion_step, act_dim=act_dim)
    jax.block_until_ready(out)

    assert out["arm_action_preds"].shape == (B, T, chunk_size, act_dim - 1)
    assert out["gripper_action_preds"].shape == (B, T, chunk_size, 1)
    assert out["diffusion_step_emb"].shape == (B, T, 1, hidden)
    print("KERNEL_OK")
</pallas_src>

<mosaic_0001>
module attributes {stable_mosaic.version = 11 : i64} {
  func.func @diff_step_kernel(%arg0: memref<2x1xf32, #tpu.memory_space<vmem>>, %arg1: memref<1x16xf32, #tpu.memory_space<vmem>>, %arg2: memref<16x128xf32, #tpu.memory_space<vmem>>, %arg3: memref<16x128xf32, #tpu.memory_space<vmem>>, %arg4: memref<1x128xf32, #tpu.memory_space<vmem>>, %arg5: memref<128x32xf32, #tpu.memory_space<vmem>>, %arg6: memref<1x32xf32, #tpu.memory_space<vmem>>, %arg7: memref<2x32xf32, #tpu.memory_space<vmem>>) attributes {dimension_semantics = [], scalar_prefetch = 0 : i64, scratch_operands = 0 : i64, tpu.core_type = #tpu.core_type<tc>} {
    %c0 = arith.constant 0 : index
    %c0_0 = arith.constant 0 : index
    %0 = vector.load %arg0[%c0, %c0_0] : memref<2x1xf32, #tpu.memory_space<vmem>>, vector<2x1xf32>
    %c0_1 = arith.constant 0 : index
    %c0_2 = arith.constant 0 : index
    %1 = vector.load %arg1[%c0_1, %c0_2] : memref<1x16xf32, #tpu.memory_space<vmem>>, vector<1x16xf32>
    %2 = vector.broadcast %0 : vector<2x1xf32> to vector<2x16xf32>
    %3 = vector.broadcast %1 : vector<1x16xf32> to vector<2x16xf32>
    %4 = arith.mulf %2, %3 : vector<2x16xf32>
    %5 = math.sin %4 : vector<2x16xf32>
    %6 = math.cos %4 : vector<2x16xf32>
    %c0_3 = arith.constant 0 : index
    %c0_4 = arith.constant 0 : index
    %7 = vector.load %arg2[%c0_3, %c0_4] : memref<16x128xf32, #tpu.memory_space<vmem>>, vector<16x128xf32>
    %cst = arith.constant dense<0.000000e+00> : vector<2x128xf32>
    %8 = tpu.matmul %5, %7, %cst {dimension_numbers = #tpu.dot_dimension_numbers<[1], [0], [0], [1], [0, 0, 1, 1], [], []>} : vector<2x16xf32>, vector<16x128xf32>, vector<2x128xf32> -> vector<2x128xf32>
    %c0_5 = arith.constant 0 : index
    %c0_6 = arith.constant 0 : index
    %9 = vector.load %arg3[%c0_5, %c0_6] : memref<16x128xf32, #tpu.memory_space<vmem>>, vector<16x128xf32>
    %cst_7 = arith.constant dense<0.000000e+00> : vector<2x128xf32>
    %10 = tpu.matmul %6, %9, %cst_7 {dimension_numbers = #tpu.dot_dimension_numbers<[1], [0], [0], [1], [0, 0, 1, 1], [], []>} : vector<2x16xf32>, vector<16x128xf32>, vector<2x128xf32> -> vector<2x128xf32>
    %11 = arith.addf %8, %10 : vector<2x128xf32>
    %c0_8 = arith.constant 0 : index
    %c0_9 = arith.constant 0 : index
    %12 = vector.load %arg4[%c0_8, %c0_9] : memref<1x128xf32, #tpu.memory_space<vmem>>, vector<1x128xf32>
    %13 = vector.broadcast %12 : vector<1x128xf32> to vector<2x128xf32>
    %14 = arith.addf %11, %13 : vector<2x128xf32>
    %cst_10 = arith.constant 0.000000e+00 : f32
    %15 = vector.broadcast %cst_10 : f32 to vector<2x128xf32>
    %16 = arith.maximumf %14, %15 : vector<2x128xf32>
    %17 = vector.broadcast %cst_10 : f32 to vector<2x128xf32>
    %18 = arith.subf %14, %17 : vector<2x128xf32>
    %19 = arith.cmpf one, %18, %18 : vector<2x128xf32>
    %20 = vector.broadcast %cst_10 : f32 to vector<2x128xf32>
    %21 = arith.addf %14, %20 : vector<2x128xf32>
    %22 = math.absf %18 : vector<2x128xf32>
    %cst_11 = arith.constant 0.000000e+00 : f32
    %23 = vector.broadcast %cst_11 : f32 to vector<2x128xf32>
    %24 = arith.subf %23, %22 : vector<2x128xf32>
    %25 = math.exp %24 : vector<2x128xf32>
    %26 = math.log1p %25 : vector<2x128xf32>
    %27 = arith.addf %16, %26 : vector<2x128xf32>
    %28 = arith.select %19, %21, %27 : vector<2x128xi1>, vector<2x128xf32>
    %29 = math.tanh %28 : vector<2x128xf32>
    %30 = arith.mulf %14, %29 : vector<2x128xf32>
    %c0_12 = arith.constant 0 : index
    %c0_13 = arith.constant 0 : index
    %31 = vector.load %arg5[%c0_12, %c0_13] : memref<128x32xf32, #tpu.memory_space<vmem>>, vector<128x32xf32>
    %cst_14 = arith.constant dense<0.000000e+00> : vector<2x32xf32>
    %32 = tpu.matmul %30, %31, %cst_14 {dimension_numbers = #tpu.dot_dimension_numbers<[1], [0], [0], [1], [0, 0, 1, 1], [], []>} : vector<2x128xf32>, vector<128x32xf32>, vector<2x32xf32> -> vector<2x32xf32>
    %c0_15 = arith.constant 0 : index
    %c0_16 = arith.constant 0 : index
    %33 = vector.load %arg6[%c0_15, %c0_16] : memref<1x32xf32, #tpu.memory_space<vmem>>, vector<1x32xf32>
    %34 = vector.broadcast %33 : vector<1x32xf32> to vector<2x32xf32>
    %35 = arith.addf %32, %34 : vector<2x32xf32>
    %c0_17 = arith.constant 0 : index
    %c0_18 = arith.constant 0 : index
    %36 = vector.load %arg7[%c0_17, %c0_18] : memref<2x32xf32, #tpu.memory_space<vmem>>, vector<2x32xf32>
    tpu.vector_store %arg7[%c0_17, %c0_18], %35 {strides = array<i32>} : memref<2x32xf32, #tpu.memory_space<vmem>>, vector<2x32xf32>,
    return
  }
}

</mosaic_0001>

<llo_original>
// kernel: tpu_custom_call.1
$region0: #{tpu_custom_call.1}
  #allocation0 [shape = 'u32[]', space=smem, size = 0x4, offset = 0x4, fixed_abs, tag = 'smem constant byte address 0x4 - core index']
  #allocation1 [shape = 'u32[144,128]{1,0:T(1,128)}', space=vmem, size = 0x12000, scoped, tag = 'internal scratch']
  %s0 = inlined_call_operand.vmem [shape: f32[2,1], index: 0, kind: input, shape index: {}]
  %s1 = inlined_call_operand.vmem [shape: f32[1,16], index: 1, kind: input, shape index: {}]
  %s2 = inlined_call_operand.vmem [shape: f32[16,128], index: 2, kind: input, shape index: {}]
  %s3 = inlined_call_operand.vmem [shape: f32[16,128], index: 3, kind: input, shape index: {}]
  %s4 = inlined_call_operand.vmem [shape: f32[1,128], index: 4, kind: input, shape index: {}]
  %s5 = inlined_call_operand.vmem [shape: f32[128,32], index: 5, kind: input, shape index: {}]
  %s6 = inlined_call_operand.vmem [shape: f32[1,32], index: 6, kind: input, shape index: {}]
  %s7 = inlined_call_operand.hbm [shape: f32[2,32], index: 7, kind: output, shape index: {}]
  %s8 = sld [smem:[#allocation0]]
  $region38: #{tpu_custom_call.1} parent=0
    _
  %s10 = ssub.s32 1, %s8
  %s11 = scalar_select 0, %s10, %s8
  $region1: #{tpu_custom_call.1} parent=0
    #allocation2 [shape = 'u8[1024]{0}', space=vmem, size = 0x400, scoped, tag = 'output window, operand 0, single buffered']
    #allocation3 [shape = 's32[1]{0}', space=sflag, size = 0x4, scoped, tag = 'scoped memory for tpu_custom_call.1']
    %12 = vsyncpa [#allocation3], 0
    // Predicated region
    $region2: #{tpu_custom_call.1} parent=1 // pred_check
      _
    $region3: #{tpu_custom_call.1} parent=1 // pred_check_branch
      %14 = sbr.rel (0) target = $region5
    $region4: #{tpu_custom_call.1} parent=1 // pred_region
      _
    $region5: #{tpu_custom_call.1} parent=1 // pred_fallthru
      _
    // Predicated region
    $region6: #{tpu_custom_call.1} parent=1 // pred_check
      _
    $region7: #{tpu_custom_call.1} parent=1 // pred_check_branch
      %16 = sbr.rel (0) target = $region9
    $region8: #{tpu_custom_call.1} parent=1 // pred_region
      _
    $region9: #{tpu_custom_call.1} parent=1 // pred_fallthru
      _
    // Predicated region
    $region10: #{tpu_custom_call.1} parent=1 // pred_check
      _
    $region11: #{tpu_custom_call.1} parent=1 // pred_check_branch
      %18 = sbr.rel (0) target = $region13
    $region12: #{tpu_custom_call.1} parent=1 // pred_region
      _
    $region13: #{tpu_custom_call.1} parent=1 // pred_fallthru
      _
    // Predicated region
    $region14: #{tpu_custom_call.1} parent=1 // pred_check
      _
    $region15: #{tpu_custom_call.1} parent=1 // pred_check_branch
      %20 = sbr.rel (0) target = $region17
    $region16: #{tpu_custom_call.1} parent=1 // pred_region
      _
    $region17: #{tpu_custom_call.1} parent=1 // pred_fallthru
      _
    // Predicated region
    $region18: #{tpu_custom_call.1} parent=1 // pred_check
      _
    $region19: #{tpu_custom_call.1} parent=1 // pred_check_branch
      %22 = sbr.rel (0) target = $region21
    $region20: #{tpu_custom_call.1} parent=1 // pred_region
      _
    $region21: #{tpu_custom_call.1} parent=1 // pred_fallthru
      _
    // Predicated region
    $region22: #{tpu_custom_call.1} parent=1 // pred_check
      _
    $region23: #{tpu_custom_call.1} parent=1 // pred_check_branch
      %24 = sbr.rel (0) target = $region25
    $region24: #{tpu_custom_call.1} parent=1 // pred_region
      _
    $region25: #{tpu_custom_call.1} parent=1 // pred_fallthru
      _
    // Predicated region
    $region26: #{tpu_custom_call.1} parent=1 // pred_check
      _
    $region27: #{tpu_custom_call.1} parent=1 // pred_check_branch
      %26 = sbr.rel (0) target = $region29
    $region28: #{tpu_custom_call.1} parent=1 // pred_region
      _
    $region29: #{tpu_custom_call.1} parent=1 // pred_fallthru
      _
    %v27 = vld [vmem:[%s0] sm:$0x3]
    %v28 = vld [vmem:[%s1] sm:$0x1]
    %30 = vset.pattern.permute.xlu0 0
    %31 = vperm.xlu0 %30, %v27
    %v32 = vpop.permute.xlu0 %31
    %v35 = vlaneseq
    %v36 = vshrl.u32 %v35, 7
    %v37 = vsub.s32 0, %v36
    %v38 = vrot.slane %v28, %v37
    %v40 = vmul.f32 %v32, %v38
    %v41 = vand.u32 2147483647, %v40
    %vm42 = vcmp.le.f32.partialorder %v41, 0.7853982
    %vm43 = vcmp.lt.s32.totalorder %v40, 0
    %v44 = vand.u32 %v40, 2139095040
    %v45 = vshrl.u32 %v44, 23
    %v46 = vsub.s32 %v45, 127
    %v47 = vand.u32 2147483647, %v40
    %v48 = vand.u32 %v47, 8388607
    %v49 = vor.u32 %v48, 8388608
    %v50 = vsub.s32 0, %v49
    %v51 = vadd.s32 %v46, 1
    %vm52 = vcmp.gt.s32.totalorder %v51, 0
    %v53 = vsel %vm52, %v51, 0
    %v54 = vshrl.u32 %v53, 5
    %v55 = vand.u32 %v53, 31
    %v56 = vsub.s32 32, %v55
    %v57 = vshrl.u32 683565275, %v56
    %v58 = vshll.u32 683565275, %v55
    %v59 = vshrl.u32 2475754826, %v56
    %v60 = vor.u32 %v58, %v59
    %v61 = vshll.u32 2475754826, %v55
    %v62 = vshrl.u32 2131351028, %v56
    %v63 = vor.u32 %v61, %v62
    %v64 = vshll.u32 2131351028, %v55
    %v65 = vshrl.u32 2102212464, %v56
    %v66 = vor.u32 %v64, %v65
    %v67 = vshll.u32 2102212464, %v55
    %v68 = vshrl.u32 920167782, %v56
    %v69 = vor.u32 %v67, %v68
    %v70 = vshll.u32 920167782, %v55
    %v71 = vshrl.u32 1326507024, %v56
    %v72 = vor.u32 %v70, %v71
    %vm73 = vcmp.lt.s32.totalorder %v54, 1
    %vm74 = vcmp.lt.s32.totalorder %v54, 2
    %vm75 = vcmp.lt.s32.totalorder %v54, 3
    %vm76 = vcmp.lt.s32.totalorder %v54, 4
    %v77 = vsel %vm73, %v57, %v60
    %v78 = vsel %vm76, %v66, 2102212464
    %v79 = vsel %vm75, %v63, %v78
    %v80 = vsel %vm74, %v77, %v79
    %v81 = vsel %vm73, %v60, %v63
    %v82 = vsel %vm76, %v69, 920167782
    %v83 = vsel %vm75, %v66, %v82
    %v84 = vsel %vm74, %v81, %v83
    %v85 = vsel %vm73, %v63, %v66
    %v86 = vsel %vm76, %v72, 1326507024
    %v87 = vsel %vm75, %v69, %v86
    %v88 = vsel %vm74, %v85, %v87
    %v89 = vshll.u32 %v49, 8
    %v90 = vmul.u32.u64.compose %v89, %v88
    %v91 = vextract.low.u32 %v90
    %v92 = vextract.high.u32 %v90
    %v93 = vmul.u32.u64.compose %v89, %v84
    %v94 = vextract.low.u32 %v93
    %v95 = vextract.high.u32 %v93
    %v96 = vmul.u32 %v89, %v80
    %v97 = vadd.s32 %v92, %v94
    %vm98 = vc.u32 %v92, %v94
    %v99 = vadd.s32 %v95, 1
    %v100 = vsel %vm98, %v99, %v95
    %v101 = vadd.s32 %v96, %v100
    %v102 = vadd.s32 %v101, 536870912
    %v103 = vshrl.u32 %v102, 30
    %v104 = vshll.u32 %v103, 30
    %v105 = vsub.s32 %v101, %v104
    %vm106 = vcmp.lt.s32.totalorder %v105, 0
    %v107 = vsub.s32 0, %v105
    %v108 = vsel %vm106, %v107, %v105
    %v109 = vclz %v108
    %v110 = vsub.s32 %v109, 2
    %vm111 = vcmp.gt.s32.totalorder 0, %v110
    %v112 = vsel %vm111, 0, %v110
    %v113 = vsub.s32 32, %v112
    %v114 = vshll.u32 %v105, %v112
    %v115 = vshrl.u32 %v97, %v113
    %v116 = vor.u32 %v114, %v115
    %v117 = vsub.s32 4294967266, %v112
    %v118 = vadd.s32 %v117, 127
    %v119 = vshll.u32 %v118, 23
    %v120 = vor.u32 4788187, %v119
    %v121 = vand.u32 2147483647, %v120
    %v123 = vcvt.s32.f32 %v116
    %v124 = vmul.f32 %v123, %v121
    %v125 = vxor.u32 %v124, 2147483648
    %v126 = vsel %vm43, %v125, %v124
    %v127 = vsub.s32 4, %v103
    %v128 = vsel %vm43, %v127, %v103
    %v129 = vsel %vm42, %v40, %v126
    %v130 = vsel %vm42, 0, %v128
    %v131 = vcosq.f32.pop %v129
    %v132 = vsinq.f32.pop %v129
    %vm133 = vweird.f32 %v40
    %v134 = vadd.s32 %v130, 3
    %v135 = vand.u32 %v134, 3
    %vm136 = vcmp.lt.s32.totalorder %v135, 2
    %vm137 = vcmp.eq.s32.totalorder %v135, 0
    %v138 = vxor.u32 %v132, 2147483648
    %v139 = vsel %vm137, %v131, %v138
    %vm140 = vcmp.eq.s32.totalorder %v135, 2
    %v141 = vxor.u32 %v131, 2147483648
    %v142 = vsel %vm140, %v141, %v132
    %v143 = vsel %vm136, %v139, %v142
    %v144 = vsel %vm133, nan, %v143
    %v145 = vand.u32 2147483647, %v40
    %vm146 = vcmp.le.f32.partialorder %v145, 0.7853982
    %vm147 = vcmp.lt.s32.totalorder %v40, 0
    %v148 = vand.u32 %v40, 2139095040
    %v149 = vshrl.u32 %v148, 23
    %v150 = vsub.s32 %v149, 127
    %v151 = vand.u32 2147483647, %v40
    %v152 = vand.u32 %v151, 8388607
    %v153 = vor.u32 %v152, 8388608
    %v154 = vsub.s32 0, %v153
    %v155 = vadd.s32 %v150, 1
    %vm156 = vcmp.gt.s32.totalorder %v155, 0
    %v157 = vsel %vm156, %v155, 0
    %v158 = vshrl.u32 %v157, 5
    %v159 = vand.u32 %v157, 31
    %v160 = vsub.s32 32, %v159
    %v161 = vshrl.u32 683565275, %v160
    %v162 = vshll.u32 683565275, %v159
    %v163 = vshrl.u32 2475754826, %v160
    %v164 = vor.u32 %v162, %v163
    %v165 = vshll.u32 2475754826, %v159
    %v166 = vshrl.u32 2131351028, %v160
    %v167 = vor.u32 %v165, %v166
    %v168 = vshll.u32 2131351028, %v159
    %v169 = vshrl.u32 2102212464, %v160
    %v170 = vor.u32 %v168, %v169
    %v171 = vshll.u32 2102212464, %v159
    %v172 = vshrl.u32 920167782, %v160
    %v173 = vor.u32 %v171, %v172
    %v174 = vshll.u32 920167782, %v159
    %v175 = vshrl.u32 1326507024, %v160
    %v176 = vor.u32 %v174, %v175
    %vm177 = vcmp.lt.s32.totalorder %v158, 1
    %vm178 = vcmp.lt.s32.totalorder %v158, 2
    %vm179 = vcmp.lt.s32.totalorder %v158, 3
    %vm180 = vcmp.lt.s32.totalorder %v158, 4
    %v181 = vsel %vm177, %v161, %v164
    %v182 = vsel %vm180, %v170, 2102212464
    %v183 = vsel %vm179, %v167, %v182
    %v184 = vsel %vm178, %v181, %v183
    %v185 = vsel %vm177, %v164, %v167
    %v186 = vsel %vm180, %v173, 920167782
    %v187 = vsel %vm179, %v170, %v186
    %v188 = vsel %vm178, %v185, %v187
    %v189 = vsel %vm177, %v167, %v170
    %v190 = vsel %vm180, %v176, 1326507024
    %v191 = vsel %vm179, %v173, %v190
    %v192 = vsel %vm178, %v189, %v191
    %v193 = vshll.u32 %v153, 8
    %v194 = vmul.u32.u64.compose %v193, %v192
    %v195 = vextract.low.u32 %v194
    %v196 = vextract.high.u32 %v194
    %v197 = vmul.u32.u64.compose %v193, %v188
    %v198 = vextract.low.u32 %v197
    %v199 = vextract.high.u32 %v197
    %v200 = vmul.u32 %v193, %v184
    %v201 = vadd.s32 %v196, %v198
    %vm202 = vc.u32 %v196, %v198
    %v203 = vadd.s32 %v199, 1
    %v204 = vsel %vm202, %v203, %v199
    %v205 = vadd.s32 %v200, %v204
    %v206 = vadd.s32 %v205, 536870912
    %v207 = vshrl.u32 %v206, 30
    %v208 = vshll.u32 %v207, 30
    %v209 = vsub.s32 %v205, %v208
    %vm210 = vcmp.lt.s32.totalorder %v209, 0
    %v211 = vsub.s32 0, %v209
    %v212 = vsel %vm210, %v211, %v209
    %v213 = vclz %v212
    %v214 = vsub.s32 %v213, 2
    %vm215 = vcmp.gt.s32.totalorder 0, %v214
    %v216 = vsel %vm215, 0, %v214
    %v217 = vsub.s32 32, %v216
    %v218 = vshll.u32 %v209, %v216
    %v219 = vshrl.u32 %v201, %v217
    %v220 = vor.u32 %v218, %v219
    %v221 = vsub.s32 4294967266, %v216
    %v222 = vadd.s32 %v221, 127
    %v223 = vshll.u32 %v222, 23
    %v224 = vor.u32 4788187, %v223
    %v225 = vand.u32 2147483647, %v224
    %v227 = vcvt.s32.f32 %v220
    %v228 = vmul.f32 %v227, %v225
    %v229 = vxor.u32 %v228, 2147483648
    %v230 = vsel %vm147, %v229, %v228
    %v231 = vsub.s32 4, %v207
    %v232 = vsel %vm147, %v231, %v207
    %v233 = vsel %vm146, %v40, %v230
    %v234 = vsel %vm146, 0, %v232
    %v235 = vcosq.f32.pop %v233
    %v236 = vsinq.f32.pop %v233
    %vm237 = vweird.f32 %v40
    %v238 = vand.u32 %v234, 3
    %vm239 = vcmp.lt.s32.totalorder %v238, 2
    %vm240 = vcmp.eq.s32.totalorder %v238, 0
    %v241 = vxor.u32 %v236, 2147483648
    %v242 = vsel %vm240, %v235, %v241
    %vm243 = vcmp.eq.s32.totalorder %v238, 2
    %v244 = vxor.u32 %v235, 2147483648
    %v245 = vsel %vm243, %v244, %v236
    %v246 = vsel %vm239, %v242, %v245
    %v247 = vsel %vm237, nan, %v246
    %v248 = vld [vmem:[%s2] sm:$0xff]
    %v249 = vld [vmem:[%s2 + $0x8] sm:$0xff]
    %v250 = vld [vmem:[%s3] sm:$0xff]
    %v251 = vld [vmem:[%s3 + $0x8] sm:$0xff]
    %vm252 = vcmask 130048
    %v254 = vsel %vm252, %v247, 0
    %256 = vmatprep.subr.mxu0 0.0
    %257 = vmatpush1.msra.mxu0 0.0
    %258 = vmatprep.subr.mxu0 0.0
    %259 = vmatpush1.msra.mxu0 0.0
    %260 = vmatprep.subr.mxu0 0.0
    %261 = vmatpush1.msra.mxu0 0.0
    %262 = vmatprep.subr.mxu0 0.0
    %263 = vmatpush1.msra.mxu0 0.0
    %264 = vmatprep.subr.mxu0 0.0
    %265 = vmatpush1.msra.mxu0 0.0
    %266 = vmatprep.subr.mxu0 0.0
    %267 = vmatpush1.msra.mxu0 0.0
    %268 = vmatprep.subr.mxu0 0.0
    %269 = vmatpush1.msra.mxu0 0.0
    %270 = vmatprep.subr.mxu0 0.0
    %271 = vmatpush1.msra.mxu0 0.0
    %272 = vmatprep.subr.mxu0 0.0
    %273 = vmatpush1.msra.mxu0 0.0
    %274 = vmatprep.subr.mxu0 0.0
    %275 = vmatpush1.msra.mxu0 0.0
    %276 = vmatprep.subr.mxu0 0.0
    %277 = vmatpush1.msra.mxu0 0.0
    %278 = vmatprep.subr.mxu0 0.0
    %279 = vmatpush1.msra.mxu0 0.0
    %280 = vmatprep.subr.mxu0 0.0
    %281 = vmatpush1.msra.mxu0 0.0
    %282 = vmatprep.subr.mxu0 0.0
    %283 = vmatpush1.msra.mxu0 0.0
    %284 = vmatprep.subr.mxu0 0.0
    %285 = vmatpush1.msra.mxu0 %v251
    %286 = vmatprep.subr.mxu0 0.0
    %287 = vmatpush1.msra.mxu0 %v250
    %288 = vmatprep.subr.mxu0 0.0
    %289 = vmatpush2.msra.mxu0 0.0
    %290 = vmatprep.subr.mxu0 0.0
    %291 = vmatpush2.msra.mxu0 0.0
    %292 = vmatprep.subr.mxu0 0.0
    %293 = vmatpush2.msra.mxu0 0.0
    %294 = vmatprep.subr.mxu0 0.0
    %295 = vmatpush2.msra.mxu0 0.0
    %296 = vmatprep.subr.mxu0 0.0
    %297 = vmatpush2.msra.mxu0 0.0
    %298 = vmatprep.subr.mxu0 0.0
    %299 = vmatpush2.msra.mxu0 0.0
    %300 = vmatprep.subr.mxu0 0.0
    %301 = vmatpush2.msra.mxu0 0.0
    %302 = vmatprep.subr.mxu0 0.0
    %303 = vmatpush2.msra.mxu0 0.0
    %304 = vmatprep.subr.mxu0 0.0
    %305 = vmatpush2.msra.mxu0 0.0
    %306 = vmatprep.subr.mxu0 0.0
    %307 = vmatpush2.msra.mxu0 0.0
    %308 = vmatprep.subr.mxu0 0.0
    %309 = vmatpush2.msra.mxu0 0.0
    %310 = vmatprep.subr.mxu0 0.0
    %311 = vmatpush2.msra.mxu0 0.0
    %312 = vmatprep.subr.mxu0 0.0
    %313 = vmatpush2.msra.mxu0 0.0
    %314 = vmatprep.subr.mxu0 0.0
    %315 = vmatpush2.msra.mxu0 0.0
    %316 = vmatprep.subr.mxu0 0.0
    %317 = vmatpush2.msra.mxu0 0.0
    %318 = vmatprep.subr.mxu0 0.0
    %319 = vmatpush2.msra.mxu0 0.0
    %320 = vmatprep.mubr.f32.mxu0 0.0
    %321 = vmatmul.mubr.f32.gmra.mxu0 %v254
    %v322 = vpop.f32.mrf.mxu0
    %v323 = vadd.f32 0.0, %v322
    %v324 = vpop.f32.mrf.mxu0
    %325 = vdwg.mxu0
    %v327 = vsel %vm252, %v144, 0
    %329 = vmatprep.subr.mxu0 0.0
    %330 = vmatpush1.msra.mxu0 0.0
    %331 = vmatprep.subr.mxu0 0.0
    %332 = vmatpush1.msra.mxu0 0.0
    %333 = vmatprep.subr.mxu0 0.0
    %334 = vmatpush1.msra.mxu0 0.0
    %335 = vmatprep.subr.mxu0 0.0
    %336 = vmatpush1.msra.mxu0 0.0
    %337 = vmatprep.subr.mxu0 0.0
    %338 = vmatpush1.msra.mxu0 0.0
    %339 = vmatprep.subr.mxu0 0.0
    %340 = vmatpush1.msra.mxu0 0.0
    %341 = vmatprep.subr.mxu0 0.0
    %342 = vmatpush1.msra.mxu0 0.0
    %343 = vmatprep.subr.mxu0 0.0
    %344 = vmatpush1.msra.mxu0 0.0
    %345 = vmatprep.subr.mxu0 0.0
    %346 = vmatpush1.msra.mxu0 0.0
    %347 = vmatprep.subr.mxu0 0.0
    %348 = vmatpush1.msra.mxu0 0.0
    %349 = vmatprep.subr.mxu0 0.0
    %350 = vmatpush1.msra.mxu0 0.0
    %351 = vmatprep.subr.mxu0 0.0
    %352 = vmatpush1.msra.mxu0 0.0
    %353 = vmatprep.subr.mxu0 0.0
    %354 = vmatpush1.msra.mxu0 0.0
    %355 = vmatprep.subr.mxu0 0.0
    %356 = vmatpush1.msra.mxu0 0.0
    %357 = vmatprep.subr.mxu0 0.0
    %358 = vmatpush1.msra.mxu0 %v249
    %359 = vmatprep.subr.mxu0 0.0
    %360 = vmatpush1.msra.mxu0 %v248
    %361 = vmatprep.subr.mxu0 0.0
    %362 = vmatpush2.msra.mxu0 0.0
    %363 = vmatprep.subr.mxu0 0.0
    %364 = vmatpush2.msra.mxu0 0.0
    %365 = vmatprep.subr.mxu0 0.0
    %366 = vmatpush2.msra.mxu0 0.0
    %367 = vmatprep.subr.mxu0 0.0
    %368 = vmatpush2.msra.mxu0 0.0
    %369 = vmatprep.subr.mxu0 0.0
    %370 = vmatpush2.msra.mxu0 0.0
    %371 = vmatprep.subr.mxu0 0.0
    %372 = vmatpush2.msra.mxu0 0.0
    %373 = vmatprep.subr.mxu0 0.0
    %374 = vmatpush2.msra.mxu0 0.0
    %375 = vmatprep.subr.mxu0 0.0
    %376 = vmatpush2.msra.mxu0 0.0
    %377 = vmatprep.subr.mxu0 0.0
    %378 = vmatpush2.msra.mxu0 0.0
    %379 = vmatprep.subr.mxu0 0.0
    %380 = vmatpush2.msra.mxu0 0.0
    %381 = vmatprep.subr.mxu0 0.0
    %382 = vmatpush2.msra.mxu0 0.0
    %383 = vmatprep.subr.mxu0 0.0
    %384 = vmatpush2.msra.mxu0 0.0
    %385 = vmatprep.subr.mxu0 0.0
    %386 = vmatpush2.msra.mxu0 0.0
    %387 = vmatprep.subr.mxu0 0.0
    %388 = vmatpush2.msra.mxu0 0.0
    %389 = vmatprep.subr.mxu0 0.0
    %390 = vmatpush2.msra.mxu0 0.0
    %391 = vmatprep.subr.mxu0 0.0
    %392 = vmatpush2.msra.mxu0 0.0
    %393 = vmatprep.mubr.f32.mxu0 0.0
    %394 = vmatmul.mubr.f32.gmra.mxu0 %v327
    %v395 = vpop.f32.mrf.mxu0
    %v396 = vadd.f32 %v323, %v395
    %v397 = vpop.f32.mrf.mxu0
    %398 = vdwg.mxu0
    %v399 = vld [vmem:[%s4] sm:$0x1]
    %v401 = vlaneseq
    %v402 = vshrl.u32 %v401, 7
    %v403 = vsub.s32 0, %v402
    %v404 = vrot.slane %v399, %v403
    %v406 = vadd.f32 %v396, %v404
    %v407 = vmax.f32 %v406, 0.0
    %vm408 = vcmp.ne.f32.partialorder %v406, %v406
    %v409 = vadd.f32 %v406, 0.0
    %v410 = vand.u32 2147483647, %v406
    %v411 = vsub.f32 0.0, %v410
    %v412 = vmul.f32 %v411, 1.442695
    %v413 = vpow.pop %v412
    %v414 = vadd.f32 %v413, 1.0
    %v415 = vlog2.pop %v414
    %v416 = vmul.f32 %v415, 0.6931472
    %v417 = vmul.f32 -0.5, %v413
    %v418 = vadd.f32 %v417, 1.0
    %v419 = vmul.f32 %v418, %v413
    %v420 = vand.u32 2147483647, %v413
    %vm421 = vcmp.lt.f32.partialorder %v420, 0.0004427343
    %v422 = vsel %vm421, %v419, %v416
    %v423 = vadd.f32 %v407, %v422
    %v424 = vsel %vm408, %v409, %v423
    %v425 = vtanh.pop %v424
    %v426 = vmul.f32 %v406, %v425
    %v427 = vld [vmem:[%s5] sm:$0xff]
    %v428 = vld [vmem:[%s5 + $0x8] sm:$0xff]
    %v429 = vld [vmem:[%s5 + $0x10] sm:$0xff]
    %v430 = vld [vmem:[%s5 + $0x18] sm:$0xff]
    %v431 = vld [vmem:[%s5 + $0x20] sm:$0xff]
    %v432 = vld [vmem:[%s5 + $0x28] sm:$0xff]
    %v433 = vld [vmem:[%s5 + $0x30] sm:$0xff]
    %v434 = vld [vmem:[%s5 + $0x38] sm:$0xff]
    %v435 = vld [vmem:[%s5 + $0x40] sm:$0xff]
    %v436 = vld [vmem:[%s5 + $0x48] sm:$0xff]
    %v437 = vld [vmem:[%s5 + $0x50] sm:$0xff]
    %v438 = vld [vmem:[%s5 + $0x58] sm:$0xff]
    %v439 = vld [vmem:[%s5 + $0x60] sm:$0xff]
    %v440 = vld [vmem:[%s5 + $0x68] sm:$0xff]
    %v441 = vld [vmem:[%s5 + $0x70] sm:$0xff]
    %v442 = vld [vmem:[%s5 + $0x78] sm:$0xff]
    %v443 = vld [vmem:[%s6] sm:$0x1]
    %v445 = vlaneseq
    %v446 = vshrl.u32 %v445, 7
    %v447 = vsub.s32 0, %v446
    %v448 = vrot.slane %v443, %v447
    %450 = vmatprep.subr.mxu0 0.0
    %451 = vmatpush1.msra.mxu0 %v442
    %452 = vmatprep.subr.mxu0 0.0
    %453 = vmatpush1.msra.mxu0 %v441
    %454 = vmatprep.subr.mxu0 0.0
    %455 = vmatpush1.msra.mxu0 %v440
    %456 = vmatprep.subr.mxu0 0.0
    %457 = vmatpush1.msra.mxu0 %v439
    %458 = vmatprep.subr.mxu0 0.0
    %459 = vmatpush1.msra.mxu0 %v438
    %460 = vmatprep.subr.mxu0 0.0
    %461 = vmatpush1.msra.mxu0 %v437
    %462 = vmatprep.subr.mxu0 0.0
    %463 = vmatpush1.msra.mxu0 %v436
    %464 = vmatprep.subr.mxu0 0.0
    %465 = vmatpush1.msra.mxu0 %v435
    %466 = vmatprep.subr.mxu0 0.0
    %467 = vmatpush1.msra.mxu0 %v434
    %468 = vmatprep.subr.mxu0 0.0
    %469 = vmatpush1.msra.mxu0 %v433
    %470 = vmatprep.subr.mxu0 0.0
    %471 = vmatpush1.msra.mxu0 %v432
    %472 = vmatprep.subr.mxu0 0.0
    %473 = vmatpush1.msra.mxu0 %v431
    %474 = vmatprep.subr.mxu0 0.0
    %475 = vmatpush1.msra.mxu0 %v430
    %476 = vmatprep.subr.mxu0 0.0
    %477 = vmatpush1.msra.mxu0 %v429
    %478 = vmatprep.subr.mxu0 0.0
    %479 = vmatpush1.msra.mxu0 %v428
    %480 = vmatprep.subr.mxu0 0.0
    %481 = vmatpush1.msra.mxu0 %v427
    %482 = vmatprep.subr.mxu0 0.0
    %483 = vmatpush2.msra.mxu0 0.0
    %484 = vmatprep.subr.mxu0 0.0
    %485 = vmatpush2.msra.mxu0 0.0
    %486 = vmatprep.subr.mxu0 0.0
    %487 = vmatpush2.msra.mxu0 0.0
    %488 = vmatprep.subr.mxu0 0.0
    %489 = vmatpush2.msra.mxu0 0.0
    %490 = vmatprep.subr.mxu0 0.0
    %491 = vmatpush2.msra.mxu0 0.0
    %492 = vmatprep.subr.mxu0 0.0
    %493 = vmatpush2.msra.mxu0 0.0
    %494 = vmatprep.subr.mxu0 0.0
    %495 = vmatpush2.msra.mxu0 0.0
    %496 = vmatprep.subr.mxu0 0.0
    %497 = vmatpush2.msra.mxu0 0.0
    %498 = vmatprep.subr.mxu0 0.0
    %499 = vmatpush2.msra.mxu0 0.0
    %500 = vmatprep.subr.mxu0 0.0
    %501 = vmatpush2.msra.mxu0 0.0
    %502 = vmatprep.subr.mxu0 0.0
    %503 = vmatpush2.msra.mxu0 0.0
    %504 = vmatprep.subr.mxu0 0.0
    %505 = vmatpush2.msra.mxu0 0.0
    %506 = vmatprep.subr.mxu0 0.0
    %507 = vmatpush2.msra.mxu0 0.0
    %508 = vmatprep.subr.mxu0 0.0
    %509 = vmatpush2.msra.mxu0 0.0
    %510 = vmatprep.subr.mxu0 0.0
    %511 = vmatpush2.msra.mxu0 0.0
    %512 = vmatprep.subr.mxu0 0.0
    %513 = vmatpush2.msra.mxu0 0.0
    %514 = vmatprep.mubr.f32.mxu0 0.0
    %515 = vmatmul.mubr.f32.gmra.mxu0 %v426
    %v516 = vpop.f32.mrf.mxu0
    %v517 = vadd.f32 %v448, %v516
    %v518 = vpop.f32.mrf.mxu0
    %519 = vdwg.mxu0
    %vm520 = vcmask 254976
    %521 = vst.msk [vmem:[#allocation2] sm:$0x3] %vm520, %v517
    // Predicated region
    $region30: #{tpu_custom_call.1} parent=1 // pred_check
      _
    $region31: #{tpu_custom_call.1} parent=1 // pred_check_branch
      %523 = sbr.rel (0) target = $region33
    $region32: #{tpu_custom_call.1} parent=1 // pred_region
      %s525 = ssub.s32 32, 32
      %526 = vsyncadd [#allocation3], %s525
      %s528 = sshll.u32 [#allocation2], 4
      %s529 = int_to_ptr.vmem [resolvable:$true] %s528
      %531 = dma.vmem_to_hbm [thread:$0]  %s529, 32, %s7, [#allocation3]
    $region33: #{tpu_custom_call.1} parent=1 // pred_fallthru
      _
    // Predicated region
    $region34: #{tpu_custom_call.1} parent=1 // pred_check
      _
    $region35: #{tpu_custom_call.1} parent=1 // pred_check_branch
      %533 = sbr.rel (0) target = $region37
    $region36: #{tpu_custom_call.1} parent=1 // pred_region
      %534 = dma.done [#allocation3], 32
    $region37: #{tpu_custom_call.1} parent=1 // pred_fallthru
      _
    %535 = vsyncpa [#allocation3], 1

</llo_original>
